<compile_context>
chip_gen: v5e
topology: v5e:2x2
jax: 0.10.0
libtpu: 0.0.40
codegen_flags: <defaults>
</compile_context>

<pallas_src>
import jax
import jax.numpy as jnp
from jax.experimental import pallas as pl
from jax.experimental.pallas import tpu as pltpu


def _make_fuse_kernel(*, C_slow, Cout, Cin, K, alpha, T_fast, TB, M, n_tb):
    pad = (K - 1) // 2
    TBM = TB * M

    def kernel(slow_hbm, fast_ref, w_ref, b_ref, out_ref, xcol_ref, sem):
        """Grid = (N, T_blocks).

        slow_hbm : (N, C_slow, T_out*M)  raw HBM ref (memory_space=pl.ANY)
        fast_ref : (1, Cin, T_fast, M)   whole fast sample in VMEM
        w_ref    : (Cout, K*Cin)         conv weight, tap-major, BN scale folded
        b_ref    : (Cout, 1)             folded BN bias (f32)
        out_ref  : (1, C_slow+Cout, TB*M) fused-concat output block
        xcol_ref : (K*Cin, TB*M)         strided im2col scratch
        sem      : DMA semaphore for the slow-channel copy
        """
        n = pl.program_id(0)
        tb = pl.program_id(1)

        # ---- 1) fused concat: DMA slow channels HBM -> output block --------
        #         (overlaps with im2col + matmul; no vld/vst restream)
        slow_cp = pltpu.make_async_copy(
            slow_hbm.at[n, :, pl.ds(tb * TBM, TBM)],
            out_ref.at[0, 0:C_slow, :],
            sem,
        )
        slow_cp.start()

        # ---- 2) strided im2col into VMEM -----------------------------------
        #  xcol[k*Cin + ci, t*M + m] = fast[ci, (tb*TB + t)*alpha + k - pad, m]
        #  (zeros where the padded-time index falls outside [0, T_fast)).
        for k in range(K):
            rows = slice(k * Cin, (k + 1) * Cin)
            for t in range(TB):
                cols = pl.ds(t * M, M)
                t_first = t * alpha + k - pad                        # tb == 0
                t_last = ((n_tb - 1) * TB + t) * alpha + k - pad     # last tb
                if t_first >= 0 and t_last < T_fast:
                    # in range for every time-block
                    if n_tb == 1:
                        time = t_first                               # static
                    else:
                        time = (tb * TB + t) * alpha + (k - pad)
                    xcol_ref[rows, cols] = fast_ref[0, :, time, :]
                elif t_last < 0 or t_first >= T_fast:
                    # never in range: conv zero-padding region
                    xcol_ref[rows, cols] = jnp.zeros((Cin, M), xcol_ref.dtype)
                else:
                    # in range only for some time-blocks (temporal edges)
                    time = (tb * TB + t) * alpha + (k - pad)
                    valid = jnp.logical_and(time >= 0, time < T_fast)

                    @pl.when(valid)
                    def _(time=time, rows=rows, cols=cols):
                        xcol_ref[rows, cols] = fast_ref[0, :, time, :]

                    @pl.when(jnp.logical_not(valid))
                    def _(rows=rows, cols=cols):
                        xcol_ref[rows, cols] = jnp.zeros((Cin, M),
                                                         xcol_ref.dtype)

        # ---- 3) conv + folded-BN bias + ReLU: one matmul, one lane-dense store
        y = jnp.dot(w_ref[...], xcol_ref[...],
                    preferred_element_type=jnp.float32)
        y = jnp.maximum(y + b_ref[...], 0.0)
        out_ref[0, C_slow:, :] = y.astype(out_ref.dtype)

        # ---- 4) slow-channel DMA must land before the block is written back
        slow_cp.wait()

    return kernel


def _pick_time_block(T_out, M, C_tot, Cin, T_fast, K, itemsize,
                     budget=32 * 1024 * 1024):
    """Largest time block whose double-buffered VMEM footprint fits `budget`.

    Block last dims must be full (TB == T_out) or a multiple of 128 lanes.
    """
    legal = [tb for tb in range(1, T_out + 1)
             if T_out % tb == 0 and (tb == T_out or (tb * M) % 128 == 0)]

    def est(tb):
        tbm = tb * M
        return (2 * C_tot * tbm * itemsize          # output block (x2 buffers)
                + 2 * Cin * T_fast * M * itemsize   # fast block   (x2 buffers)
                + K * Cin * tbm * itemsize          # im2col scratch
                + 4096)                             # weights + bias

    fitting = [tb for tb in legal if est(tb) <= budget]
    tb = max(fitting) if fitting else min(legal)
    return tb, est(tb)


def fuse_forward(slow_input, fast_input, conv_w, gamma, beta, run_mean, run_var,
                 *, alpha, eps=1e-5):
    """slow_input: (N, C_slow, T_slow, H, W); fast_input: (N, Cin, T_fast, H, W)
    conv_w: (Cout, Cin, K, 1, 1) with Cout = 2*Cin.  Returns (slow_out, fast_input)."""
    N, Cin, T_fast, H, W = fast_input.shape
    Ns, C_slow, T_slow, Hs, Ws = slow_input.shape
    Cout, Cin_w, K, _, _ = conv_w.shape
    assert Ns == N and Hs == H and Ws == W and Cin_w == Cin
    assert slow_input.dtype == fast_input.dtype, \
        "concat requires matching slow/fast dtypes"

    pad = (K - 1) // 2
    T_out = (T_fast + 2 * pad - K) // alpha + 1
    assert T_out == T_slow, "temporal dims must match for the channel concat"
    M = H * W
    L = T_out * M
    C_tot = C_slow + Cout
    out_dtype = slow_input.dtype
    itemsize = jnp.dtype(out_dtype).itemsize

    # ---- free layout glue (pure reshapes, no HBM transpose passes) ----------
    fast_m = fast_input.reshape(N, Cin, T_fast, M)
    slow_l = slow_input.reshape(N, C_slow, L)

    # ---- fold BatchNorm (inference) into weights + per-channel bias ---------
    scale = (gamma.astype(jnp.float32)
             / jnp.sqrt(run_var.astype(jnp.float32) + eps))             # (Cout,)
    # (Cout, Cin, K) -> (Cout, K, Cin) -> (Cout, K*Cin)  [tap-major columns]
    w2 = jnp.transpose(conv_w[:, :, :, 0, 0].astype(jnp.float32),
                       (0, 2, 1)).reshape(Cout, K * Cin)
    w2 = (w2 * scale[:, None]).astype(fast_input.dtype)   # keep bf16 if bf16
    bias = (beta.astype(jnp.float32)
            - run_mean.astype(jnp.float32) * scale).reshape(Cout, 1)

    TB, vmem_est = _pick_time_block(T_out, M, C_tot, Cin, T_fast, K, itemsize)
    n_tb = T_out // TB
    TBM = TB * M
    vmem_limit = int(min(96 * 1024 * 1024,
                         max(32 * 1024 * 1024, vmem_est + 8 * 1024 * 1024)))

    kernel = _make_fuse_kernel(C_slow=C_slow, Cout=Cout, Cin=Cin, K=K,
                               alpha=alpha, T_fast=T_fast, TB=TB, M=M,
                               n_tb=n_tb)

    out = pl.pallas_call(
        kernel,
        out_shape=jax.ShapeDtypeStruct((N, C_tot, L), out_dtype),
        grid_spec=pltpu.PrefetchScalarGridSpec(
            num_scalar_prefetch=0,
            grid=(N, n_tb),
            in_specs=[
                pl.BlockSpec(memory_space=pl.ANY),                     # slow (HBM)
                pl.BlockSpec((1, Cin, T_fast, M), lambda n, tb: (n, 0, 0, 0)),
                pl.BlockSpec((Cout, K * Cin), lambda n, tb: (0, 0)),
                pl.BlockSpec((Cout, 1), lambda n, tb: (0, 0)),
            ],
            out_specs=pl.BlockSpec((1, C_tot, TBM), lambda n, tb: (n, 0, tb)),
            scratch_shapes=[
                pltpu.VMEM((K * Cin, TBM), fast_input.dtype),
                pltpu.SemaphoreType.DMA(()),
            ],
        ),
        compiler_params=pltpu.CompilerParams(
            dimension_semantics=("parallel", "parallel"),
            vmem_limit_bytes=vmem_limit,
        ),
    )(slow_l, fast_m, w2, bias)

    slow_out = out.reshape(N, C_tot, T_out, H, W)   # free reshape back to NCTHW
    return slow_out, fast_input


def _reference(slow_input, fast_input, conv_w, gamma, beta, run_mean, run_var,
               *, alpha, eps=1e-5):
    """Plain-JAX reference (conv3d + BN(eval) + ReLU + concat)."""
    y = jax.lax.conv_general_dilated(
        fast_input, conv_w,
        window_strides=(alpha, 1, 1),
        padding=((2, 2), (0, 0), (0, 0)),
        dimension_numbers=("NCDHW", "OIDHW", "NCDHW"))
    s = (gamma / jnp.sqrt(run_var + eps)).reshape(1, -1, 1, 1, 1)
    b = (beta - run_mean * gamma / jnp.sqrt(run_var + eps)).reshape(1, -1, 1, 1, 1)
    y = jnp.maximum(y * s + b, 0.0)
    return jnp.concatenate([slow_input, y], axis=1), fast_input


if __name__ == "__main__":
    key = jax.random.PRNGKey(0)
    k1, k2, k3, k4, k5, k6, k7 = jax.random.split(key, 7)

    # Small shapes consistent with the module.
    N = 2
    inputDim = 4          # fast-pathway channels
    alpha = 4             # opt['alpha'] temporal stride
    T_fast = 16
    T_slow = T_fast // alpha
    H = W = 8
    C_slow = 16
    Cout = inputDim * 2

    slow_input = jax.random.normal(k1, (N, C_slow, T_slow, H, W), jnp.float32)
    fast_input = jax.random.normal(k2, (N, inputDim, T_fast, H, W), jnp.float32)

    # Deterministic parameter init (synthetic; shapes from __init__).
    conv_w = jax.random.normal(k3, (Cout, inputDim, 5, 1, 1), jnp.float32) * 0.1
    gamma = 1.0 + 0.1 * jax.random.normal(k4, (Cout,), jnp.float32)
    beta = 0.1 * jax.random.normal(k5, (Cout,), jnp.float32)
    run_mean = 0.05 * jax.random.normal(k6, (Cout,), jnp.float32)
    run_var = jnp.abs(1.0 + 0.1 * jax.random.normal(k7, (Cout,), jnp.float32))

    slow_out, fast_out = fuse_forward(slow_input, fast_input, conv_w,
                                      gamma, beta, run_mean, run_var,
                                      alpha=alpha)
    jax.block_until_ready(slow_out)
    jax.block_until_ready(fast_out)

    slow_ref, fast_ref_out = _reference(slow_input, fast_input, conv_w,
                                        gamma, beta, run_mean, run_var,
                                        alpha=alpha)
    assert slow_out.shape == (N, C_slow + Cout, T_slow, H, W)
    assert jnp.allclose(slow_out, slow_ref, atol=1e-4, rtol=1e-4), \
        float(jnp.max(jnp.abs(slow_out - slow_ref)))
    assert jnp.allclose(fast_out, fast_ref_out)

    print("KERNEL_OK")
</pallas_src>

<mosaic_0001>
module attributes {stable_mosaic.version = 11 : i64} {
  func.func @kernel(%arg0: i32, %arg1: i32, %arg2: memref<2x16x256xf32, #tpu.memory_space<any>>, %arg3: memref<1x4x16x64xf32, #tpu.memory_space<vmem>>, %arg4: memref<8x20xf32, #tpu.memory_space<vmem>>, %arg5: memref<8x1xf32, #tpu.memory_space<vmem>>, %arg6: memref<1x24x256xf32, #tpu.memory_space<vmem>>, %arg7: memref<20x256xf32, #tpu.memory_space<vmem>>, %arg8: memref<!tpu.dma_semaphore, #tpu.memory_space<semaphore_mem>>) attributes {dimension_semantics = [#tpu.dimension_semantics<parallel>, #tpu.dimension_semantics<parallel>], iteration_bounds = array<i64: 2, 1>, scalar_prefetch = 0 : i64, scratch_operands = 2 : i64, tpu.core_type = #tpu.core_type<tc>, window_params = [{}, {transform_indices = @transform_1, window_bounds = array<i64: 1, 4, 16, 64>}, {pipeline_mode = #tpu.pipeline_mode<synchronous>, transform_indices = @transform_2, window_bounds = array<i64: 8, 20>}, {pipeline_mode = #tpu.pipeline_mode<synchronous>, transform_indices = @transform_3, window_bounds = array<i64: 8, 1>}, {transform_indices = @transform_4, window_bounds = array<i64: 1, 24, 256>}]} {
    %c256_i32 = arith.constant 256 : i32
    %0 = arith.muli %arg1, %c256_i32 : i32
    %c0_i32 = arith.constant 0 : i32
    %c0_i32_0 = arith.constant 0 : i32
    %1 = tpu.memref_slice %arg2[%arg0, %c0_i32_0, %0] : memref<2x16x256xf32, #tpu.memory_space<any>> -> memref<1x16x256xf32, #tpu.memory_space<any>>
    %2 = tpu.memref_squeeze %1 : memref<1x16x256xf32, #tpu.memory_space<any>> -> memref<16x256xf32, #tpu.memory_space<any>>
    %c0_i32_1 = arith.constant 0 : i32
    %c0_i32_2 = arith.constant 0 : i32
    %3 = tpu.memref_slice %arg6[%c0_i32, %c0_i32_1, %c0_i32_2] : memref<1x24x256xf32, #tpu.memory_space<vmem>> -> memref<1x16x256xf32, #tpu.memory_space<vmem>>
    %4 = tpu.memref_squeeze %3 : memref<1x16x256xf32, #tpu.memory_space<vmem>> -> memref<16x256xf32, #tpu.memory_space<vmem>>
    tpu.enqueue_dma source(%2 : memref<16x256xf32, #tpu.memory_space<any>>) target(%4 : memref<16x256xf32, #tpu.memory_space<vmem>>) target_semaphore(%arg8 : memref<!tpu.dma_semaphore, #tpu.memory_space<semaphore_mem>>)
    %cst = arith.constant 0.000000e+00 : f32
    %5 = vector.broadcast %cst : f32 to vector<4x64xf32>
    %c0 = arith.constant 0 : index
    %c0_3 = arith.constant 0 : index
    %6 = vector.load %arg7[%c0, %c0_3] : memref<20x256xf32, #tpu.memory_space<vmem>>, vector<4x64xf32>
    tpu.vector_store %arg7[%c0, %c0_3], %5 {strides = array<i32>} : memref<20x256xf32, #tpu.memory_space<vmem>>, vector<4x64xf32>,
    %c0_4 = arith.constant 0 : index
    %c0_5 = arith.constant 0 : index
    %c2 = arith.constant 2 : index
    %c0_6 = arith.constant 0 : index
    %7 = vector.load %arg3[%c0_4, %c0_5, %c2, %c0_6] : memref<1x4x16x64xf32, #tpu.memory_space<vmem>>, vector<1x4x1x64xf32>
    %8 = vector.shape_cast %7 : vector<1x4x1x64xf32> to vector<4x64xf32>
    %c0_7 = arith.constant 0 : index
    %c64 = arith.constant 64 : index
    %9 = vector.load %arg7[%c0_7, %c64] : memref<20x256xf32, #tpu.memory_space<vmem>>, vector<4x64xf32>
    tpu.vector_store %arg7[%c0_7, %c64], %8 {strides = array<i32>} : memref<20x256xf32, #tpu.memory_space<vmem>>, vector<4x64xf32>,
    %c0_8 = arith.constant 0 : index
    %c0_9 = arith.constant 0 : index
    %c6 = arith.constant 6 : index
    %c0_10 = arith.constant 0 : index
    %10 = vector.load %arg3[%c0_8, %c0_9, %c6, %c0_10] : memref<1x4x16x64xf32, #tpu.memory_space<vmem>>, vector<1x4x1x64xf32>
    %11 = vector.shape_cast %10 : vector<1x4x1x64xf32> to vector<4x64xf32>
    %c0_11 = arith.constant 0 : index
    %c128 = arith.constant 128 : index
    %12 = vector.load %arg7[%c0_11, %c128] : memref<20x256xf32, #tpu.memory_space<vmem>>, vector<4x64xf32>
    tpu.vector_store %arg7[%c0_11, %c128], %11 {strides = array<i32>} : memref<20x256xf32, #tpu.memory_space<vmem>>, vector<4x64xf32>,
    %c0_12 = arith.constant 0 : index
    %c0_13 = arith.constant 0 : index
    %c10 = arith.constant 10 : index
    %c0_14 = arith.constant 0 : index
    %13 = vector.load %arg3[%c0_12, %c0_13, %c10, %c0_14] : memref<1x4x16x64xf32, #tpu.memory_space<vmem>>, vector<1x4x1x64xf32>
    %14 = vector.shape_cast %13 : vector<1x4x1x64xf32> to vector<4x64xf32>
    %c0_15 = arith.constant 0 : index
    %c192 = arith.constant 192 : index
    %15 = vector.load %arg7[%c0_15, %c192] : memref<20x256xf32, #tpu.memory_space<vmem>>, vector<4x64xf32>
    tpu.vector_store %arg7[%c0_15, %c192], %14 {strides = array<i32>} : memref<20x256xf32, #tpu.memory_space<vmem>>, vector<4x64xf32>,
    %cst_16 = arith.constant 0.000000e+00 : f32
    %16 = vector.broadcast %cst_16 : f32 to vector<4x64xf32>
    %c4 = arith.constant 4 : index
    %c0_17 = arith.constant 0 : index
    %17 = vector.load %arg7[%c4, %c0_17] : memref<20x256xf32, #tpu.memory_space<vmem>>, vector<4x64xf32>
    tpu.vector_store %arg7[%c4, %c0_17], %16 {strides = array<i32>} : memref<20x256xf32, #tpu.memory_space<vmem>>, vector<4x64xf32>,
    %c0_18 = arith.constant 0 : index
    %c0_19 = arith.constant 0 : index
    %c3 = arith.constant 3 : index
    %c0_20 = arith.constant 0 : index
    %18 = vector.load %arg3[%c0_18, %c0_19, %c3, %c0_20] : memref<1x4x16x64xf32, #tpu.memory_space<vmem>>, vector<1x4x1x64xf32>
    %19 = vector.shape_cast %18 : vector<1x4x1x64xf32> to vector<4x64xf32>
    %c4_21 = arith.constant 4 : index
    %c64_22 = arith.constant 64 : index
    %20 = vector.load %arg7[%c4_21, %c64_22] : memref<20x256xf32, #tpu.memory_space<vmem>>, vector<4x64xf32>
    tpu.vector_store %arg7[%c4_21, %c64_22], %19 {strides = array<i32>} : memref<20x256xf32, #tpu.memory_space<vmem>>, vector<4x64xf32>,
    %c0_23 = arith.constant 0 : index
    %c0_24 = arith.constant 0 : index
    %c7 = arith.constant 7 : index
    %c0_25 = arith.constant 0 : index
    %21 = vector.load %arg3[%c0_23, %c0_24, %c7, %c0_25] : memref<1x4x16x64xf32, #tpu.memory_space<vmem>>, vector<1x4x1x64xf32>
    %22 = vector.shape_cast %21 : vector<1x4x1x64xf32> to vector<4x64xf32>
    %c4_26 = arith.constant 4 : index
    %c128_27 = arith.constant 128 : index
    %23 = vector.load %arg7[%c4_26, %c128_27] : memref<20x256xf32, #tpu.memory_space<vmem>>, vector<4x64xf32>
    tpu.vector_store %arg7[%c4_26, %c128_27], %22 {strides = array<i32>} : memref<20x256xf32, #tpu.memory_space<vmem>>, vector<4x64xf32>,
    %c0_28 = arith.constant 0 : index
    %c0_29 = arith.constant 0 : index
    %c11 = arith.constant 11 : index
    %c0_30 = arith.constant 0 : index
    %24 = vector.load %arg3[%c0_28, %c0_29, %c11, %c0_30] : memref<1x4x16x64xf32, #tpu.memory_space<vmem>>, vector<1x4x1x64xf32>
    %25 = vector.shape_cast %24 : vector<1x4x1x64xf32> to vector<4x64xf32>
    %c4_31 = arith.constant 4 : index
    %c192_32 = arith.constant 192 : index
    %26 = vector.load %arg7[%c4_31, %c192_32] : memref<20x256xf32, #tpu.memory_space<vmem>>, vector<4x64xf32>
    tpu.vector_store %arg7[%c4_31, %c192_32], %25 {strides = array<i32>} : memref<20x256xf32, #tpu.memory_space<vmem>>, vector<4x64xf32>,
    %c0_33 = arith.constant 0 : index
    %c0_34 = arith.constant 0 : index
    %c0_35 = arith.constant 0 : index
    %c0_36 = arith.constant 0 : index
    %27 = vector.load %arg3[%c0_33, %c0_34, %c0_35, %c0_36] : memref<1x4x16x64xf32, #tpu.memory_space<vmem>>, vector<1x4x1x64xf32>
    %28 = vector.shape_cast %27 : vector<1x4x1x64xf32> to vector<4x64xf32>
    %c8 = arith.constant 8 : index
    %c0_37 = arith.constant 0 : index
    %29 = vector.load %arg7[%c8, %c0_37] : memref<20x256xf32, #tpu.memory_space<vmem>>, vector<4x64xf32>
    tpu.vector_store %arg7[%c8, %c0_37], %28 {strides = array<i32>} : memref<20x256xf32, #tpu.memory_space<vmem>>, vector<4x64xf32>,
    %c0_38 = arith.constant 0 : index
    %c0_39 = arith.constant 0 : index
    %c4_40 = arith.constant 4 : index
    %c0_41 = arith.constant 0 : index
    %30 = vector.load %arg3[%c0_38, %c0_39, %c4_40, %c0_41] : memref<1x4x16x64xf32, #tpu.memory_space<vmem>>, vector<1x4x1x64xf32>
    %31 = vector.shape_cast %30 : vector<1x4x1x64xf32> to vector<4x64xf32>
    %c8_42 = arith.constant 8 : index
    %c64_43 = arith.constant 64 : index
    %32 = vector.load %arg7[%c8_42, %c64_43] : memref<20x256xf32, #tpu.memory_space<vmem>>, vector<4x64xf32>
    tpu.vector_store %arg7[%c8_42, %c64_43], %31 {strides = array<i32>} : memref<20x256xf32, #tpu.memory_space<vmem>>, vector<4x64xf32>,
    %c0_44 = arith.constant 0 : index
    %c0_45 = arith.constant 0 : index
    %c8_46 = arith.constant 8 : index
    %c0_47 = arith.constant 0 : index
    %33 = vector.load %arg3[%c0_44, %c0_45, %c8_46, %c0_47] : memref<1x4x16x64xf32, #tpu.memory_space<vmem>>, vector<1x4x1x64xf32>
    %34 = vector.shape_cast %33 : vector<1x4x1x64xf32> to vector<4x64xf32>
    %c8_48 = arith.constant 8 : index
    %c128_49 = arith.constant 128 : index
    %35 = vector.load %arg7[%c8_48, %c128_49] : memref<20x256xf32, #tpu.memory_space<vmem>>, vector<4x64xf32>
    tpu.vector_store %arg7[%c8_48, %c128_49], %34 {strides = array<i32>} : memref<20x256xf32, #tpu.memory_space<vmem>>, vector<4x64xf32>,
    %c0_50 = arith.constant 0 : index
    %c0_51 = arith.constant 0 : index
    %c12 = arith.constant 12 : index
    %c0_52 = arith.constant 0 : index
    %36 = vector.load %arg3[%c0_50, %c0_51, %c12, %c0_52] : memref<1x4x16x64xf32, #tpu.memory_space<vmem>>, vector<1x4x1x64xf32>
    %37 = vector.shape_cast %36 : vector<1x4x1x64xf32> to vector<4x64xf32>
    %c8_53 = arith.constant 8 : index
    %c192_54 = arith.constant 192 : index
    %38 = vector.load %arg7[%c8_53, %c192_54] : memref<20x256xf32, #tpu.memory_space<vmem>>, vector<4x64xf32>
    tpu.vector_store %arg7[%c8_53, %c192_54], %37 {strides = array<i32>} : memref<20x256xf32, #tpu.memory_space<vmem>>, vector<4x64xf32>,
    %c0_55 = arith.constant 0 : index
    %c0_56 = arith.constant 0 : index
    %c1 = arith.constant 1 : index
    %c0_57 = arith.constant 0 : index
    %39 = vector.load %arg3[%c0_55, %c0_56, %c1, %c0_57] : memref<1x4x16x64xf32, #tpu.memory_space<vmem>>, vector<1x4x1x64xf32>
    %40 = vector.shape_cast %39 : vector<1x4x1x64xf32> to vector<4x64xf32>
    %c12_58 = arith.constant 12 : index
    %c0_59 = arith.constant 0 : index
    %41 = vector.load %arg7[%c12_58, %c0_59] : memref<20x256xf32, #tpu.memory_space<vmem>>, vector<4x64xf32>
    tpu.vector_store %arg7[%c12_58, %c0_59], %40 {strides = array<i32>} : memref<20x256xf32, #tpu.memory_space<vmem>>, vector<4x64xf32>,
    %c0_60 = arith.constant 0 : index
    %c0_61 = arith.constant 0 : index
    %c5 = arith.constant 5 : index
    %c0_62 = arith.constant 0 : index
    %42 = vector.load %arg3[%c0_60, %c0_61, %c5, %c0_62] : memref<1x4x16x64xf32, #tpu.memory_space<vmem>>, vector<1x4x1x64xf32>
    %43 = vector.shape_cast %42 : vector<1x4x1x64xf32> to vector<4x64xf32>
    %c12_63 = arith.constant 12 : index
    %c64_64 = arith.constant 64 : index
    %44 = vector.load %arg7[%c12_63, %c64_64] : memref<20x256xf32, #tpu.memory_space<vmem>>, vector<4x64xf32>
    tpu.vector_store %arg7[%c12_63, %c64_64], %43 {strides = array<i32>} : memref<20x256xf32, #tpu.memory_space<vmem>>, vector<4x64xf32>,
    %c0_65 = arith.constant 0 : index
    %c0_66 = arith.constant 0 : index
    %c9 = arith.constant 9 : index
    %c0_67 = arith.constant 0 : index
    %45 = vector.load %arg3[%c0_65, %c0_66, %c9, %c0_67] : memref<1x4x16x64xf32, #tpu.memory_space<vmem>>, vector<1x4x1x64xf32>
    %46 = vector.shape_cast %45 : vector<1x4x1x64xf32> to vector<4x64xf32>
    %c12_68 = arith.constant 12 : index
    %c128_69 = arith.constant 128 : index
    %47 = vector.load %arg7[%c12_68, %c128_69] : memref<20x256xf32, #tpu.memory_space<vmem>>, vector<4x64xf32>
    tpu.vector_store %arg7[%c12_68, %c128_69], %46 {strides = array<i32>} : memref<20x256xf32, #tpu.memory_space<vmem>>, vector<4x64xf32>,
    %c0_70 = arith.constant 0 : index
    %c0_71 = arith.constant 0 : index
    %c13 = arith.constant 13 : index
    %c0_72 = arith.constant 0 : index
    %48 = vector.load %arg3[%c0_70, %c0_71, %c13, %c0_72] : memref<1x4x16x64xf32, #tpu.memory_space<vmem>>, vector<1x4x1x64xf32>
    %49 = vector.shape_cast %48 : vector<1x4x1x64xf32> to vector<4x64xf32>
    %c12_73 = arith.constant 12 : index
    %c192_74 = arith.constant 192 : index
    %50 = vector.load %arg7[%c12_73, %c192_74] : memref<20x256xf32, #tpu.memory_space<vmem>>, vector<4x64xf32>
    tpu.vector_store %arg7[%c12_73, %c192_74], %49 {strides = array<i32>} : memref<20x256xf32, #tpu.memory_space<vmem>>, vector<4x64xf32>,
    %c0_75 = arith.constant 0 : index
    %c0_76 = arith.constant 0 : index
    %c2_77 = arith.constant 2 : index
    %c0_78 = arith.constant 0 : index
    %51 = vector.load %arg3[%c0_75, %c0_76, %c2_77, %c0_78] : memref<1x4x16x64xf32, #tpu.memory_space<vmem>>, vector<1x4x1x64xf32>
    %52 = vector.shape_cast %51 : vector<1x4x1x64xf32> to vector<4x64xf32>
    %c16 = arith.constant 16 : index
    %c0_79 = arith.constant 0 : index
    %53 = vector.load %arg7[%c16, %c0_79] : memref<20x256xf32, #tpu.memory_space<vmem>>, vector<4x64xf32>
    tpu.vector_store %arg7[%c16, %c0_79], %52 {strides = array<i32>} : memref<20x256xf32, #tpu.memory_space<vmem>>, vector<4x64xf32>,
    %c0_80 = arith.constant 0 : index
    %c0_81 = arith.constant 0 : index
    %c6_82 = arith.constant 6 : index
    %c0_83 = arith.constant 0 : index
    %54 = vector.load %arg3[%c0_80, %c0_81, %c6_82, %c0_83] : memref<1x4x16x64xf32, #tpu.memory_space<vmem>>, vector<1x4x1x64xf32>
    %55 = vector.shape_cast %54 : vector<1x4x1x64xf32> to vector<4x64xf32>
    %c16_84 = arith.constant 16 : index
    %c64_85 = arith.constant 64 : index
    %56 = vector.load %arg7[%c16_84, %c64_85] : memref<20x256xf32, #tpu.memory_space<vmem>>, vector<4x64xf32>
    tpu.vector_store %arg7[%c16_84, %c64_85], %55 {strides = array<i32>} : memref<20x256xf32, #tpu.memory_space<vmem>>, vector<4x64xf32>,
    %c0_86 = arith.constant 0 : index
    %c0_87 = arith.constant 0 : index
    %c10_88 = arith.constant 10 : index
    %c0_89 = arith.constant 0 : index
    %57 = vector.load %arg3[%c0_86, %c0_87, %c10_88, %c0_89] : memref<1x4x16x64xf32, #tpu.memory_space<vmem>>, vector<1x4x1x64xf32>
    %58 = vector.shape_cast %57 : vector<1x4x1x64xf32> to vector<4x64xf32>
    %c16_90 = arith.constant 16 : index
    %c128_91 = arith.constant 128 : index
    %59 = vector.load %arg7[%c16_90, %c128_91] : memref<20x256xf32, #tpu.memory_space<vmem>>, vector<4x64xf32>
    tpu.vector_store %arg7[%c16_90, %c128_91], %58 {strides = array<i32>} : memref<20x256xf32, #tpu.memory_space<vmem>>, vector<4x64xf32>,
    %c0_92 = arith.constant 0 : index
    %c0_93 = arith.constant 0 : index
    %c14 = arith.constant 14 : index
    %c0_94 = arith.constant 0 : index
    %60 = vector.load %arg3[%c0_92, %c0_93, %c14, %c0_94] : memref<1x4x16x64xf32, #tpu.memory_space<vmem>>, vector<1x4x1x64xf32>
    %61 = vector.shape_cast %60 : vector<1x4x1x64xf32> to vector<4x64xf32>
    %c16_95 = arith.constant 16 : index
    %c192_96 = arith.constant 192 : index
    %62 = vector.load %arg7[%c16_95, %c192_96] : memref<20x256xf32, #tpu.memory_space<vmem>>, vector<4x64xf32>
    tpu.vector_store %arg7[%c16_95, %c192_96], %61 {strides = array<i32>} : memref<20x256xf32, #tpu.memory_space<vmem>>, vector<4x64xf32>,
    %c0_97 = arith.constant 0 : index
    %c0_98 = arith.constant 0 : index
    %63 = vector.load %arg4[%c0_97, %c0_98] : memref<8x20xf32, #tpu.memory_space<vmem>>, vector<8x20xf32>
    %c0_99 = arith.constant 0 : index
    %c0_100 = arith.constant 0 : index
    %64 = vector.load %arg7[%c0_99, %c0_100] : memref<20x256xf32, #tpu.memory_space<vmem>>, vector<20x256xf32>
    %cst_101 = arith.constant dense<0.000000e+00> : vector<8x256xf32>
    %65 = tpu.matmul %63, %64, %cst_101 {dimension_numbers = #tpu.dot_dimension_numbers<[1], [0], [0], [1], [0, 0, 1, 1], [], []>} : vector<8x20xf32>, vector<20x256xf32>, vector<8x256xf32> -> vector<8x256xf32>
    %c0_102 = arith.constant 0 : index
    %c0_103 = arith.constant 0 : index
    %66 = vector.load %arg5[%c0_102, %c0_103] : memref<8x1xf32, #tpu.memory_space<vmem>>, vector<8x1xf32>
    %67 = vector.broadcast %66 : vector<8x1xf32> to vector<8x256xf32>
    %68 = arith.addf %65, %67 : vector<8x256xf32>
    %cst_104 = arith.constant 0.000000e+00 : f32
    %69 = vector.broadcast %cst_104 : f32 to vector<8x256xf32>
    %70 = arith.maximumf %68, %69 : vector<8x256xf32>
    %c0_105 = arith.constant 0 : index
    %c16_106 = arith.constant 16 : index
    %c0_107 = arith.constant 0 : index
    %71 = vector.load %arg6[%c0_105, %c16_106, %c0_107] : memref<1x24x256xf32, #tpu.memory_space<vmem>>, vector<1x8x256xf32>
    %72 = vector.shape_cast %71 : vector<1x8x256xf32> to vector<8x256xf32>
    %73 = vector.shape_cast %70 : vector<8x256xf32> to vector<1x8x256xf32>
    tpu.vector_store %arg6[%c0_105, %c16_106, %c0_107], %73 {strides = array<i32>} : memref<1x24x256xf32, #tpu.memory_space<vmem>>, vector<1x8x256xf32>,
    %c0_i32_108 = arith.constant 0 : i32
    %c0_i32_109 = arith.constant 0 : i32
    %74 = tpu.memref_slice %arg2[%arg0, %c0_i32_109, %0] : memref<2x16x256xf32, #tpu.memory_space<any>> -> memref<1x16x256xf32, #tpu.memory_space<any>>
    %75 = tpu.memref_squeeze %74 : memref<1x16x256xf32, #tpu.memory_space<any>> -> memref<16x256xf32, #tpu.memory_space<any>>
    %c0_i32_110 = arith.constant 0 : i32
    %c0_i32_111 = arith.constant 0 : i32
    %76 = tpu.memref_slice %arg6[%c0_i32_108, %c0_i32_110, %c0_i32_111] : memref<1x24x256xf32, #tpu.memory_space<vmem>> -> memref<1x16x256xf32, #tpu.memory_space<vmem>>
    %77 = tpu.memref_squeeze %76 : memref<1x16x256xf32, #tpu.memory_space<vmem>> -> memref<16x256xf32, #tpu.memory_space<vmem>>
    tpu.wait_dma2 semaphore(%arg8 : memref<!tpu.dma_semaphore, #tpu.memory_space<semaphore_mem>>) src(%75 : memref<16x256xf32, #tpu.memory_space<any>>) dst(%77 : memref<16x256xf32, #tpu.memory_space<vmem>>)
    return
  }
  func.func @transform_1(%arg0: i32, %arg1: i32) -> (i32, i32, i32, i32) {
    %c0_i32 = arith.constant 0 : i32
    %c0_i32_0 = arith.constant 0 : i32
    %c0_i32_1 = arith.constant 0 : i32
    %c0_i32_2 = arith.constant 0 : i32
    return %arg0, %c0_i32, %c0_i32_0, %c0_i32_1 : i32, i32, i32, i32
  }
  func.func @transform_2(%arg0: i32, %arg1: i32) -> (i32, i32) {
    %c0_i32 = arith.constant 0 : i32
    %c0_i32_0 = arith.constant 0 : i32
    %c0_i32_1 = arith.constant 0 : i32
    return %c0_i32, %c0_i32_0 : i32, i32
  }
  func.func @transform_3(%arg0: i32, %arg1: i32) -> (i32, i32) {
    %c0_i32 = arith.constant 0 : i32
    %c0_i32_0 = arith.constant 0 : i32
    %c0_i32_1 = arith.constant 0 : i32
    return %c0_i32, %c0_i32_0 : i32, i32
  }
  func.func @transform_4(%arg0: i32, %arg1: i32) -> (i32, i32, i32) {
    %c0_i32 = arith.constant 0 : i32
    %c0_i32_0 = arith.constant 0 : i32
    return %arg0, %c0_i32, %arg1 : i32, i32, i32
  }
}

</mosaic_0001>

<llo_original>
// kernel: tpu_custom_call.1
$region0: #{tpu_custom_call.1}
  #allocation0 [shape = 'u32[]', space=smem, size = 0x4, offset = 0x4, fixed_abs, tag = 'smem constant byte address 0x4 - core index']
  #allocation1 [shape = 'u32[72,128]{1,0:T(1,128)}', space=vmem, size = 0x9000, scoped, tag = 'internal scratch']
  #allocation2 [shape = 'f32[20,256]{1,0:T(8,128)}', space=vmem, size = 0x6000, scoped, tag = 'scratch operand']
  #allocation3 [shape = 's32[1]{0}', space=sflag, size = 0x4, scoped, tag = 'scratch operand']
  #allocation8 [shape = 's32[]', space=sflag, size = 0x4, offset = 0, fixed_abs, tag = 'sflag constant byte address 0x0 - dummy sync flag']
  #allocation9 [shape = 's32[]', space=sflag, size = 0x4, offset = 0, fixed_abs, tag = 'sflag constant byte address 0x0 - dummy sync flag']
  #allocation10 [shape = 'u32[]', space=smem, size = 0x4, offset = 0x44, fixed_abs, tag = 'smem constant byte address 0x44 - assertion arg 0']
  #allocation11 [shape = 'u32[]', space=smem, size = 0x4, offset = 0x48, fixed_abs, tag = 'smem constant byte address 0x48 - assertion arg 1']
  %s0 = inlined_call_operand.hbm [shape: f32[2,16,256], index: 0, kind: input, shape index: {}]
  %s1 = inlined_call_operand.hbm [shape: f32[2,4,16,64], index: 1, kind: input, shape index: {}]
  %s2 = inlined_call_operand.vmem [shape: f32[8,20], index: 2, kind: input, shape index: {}]
  %s3 = inlined_call_operand.vmem [shape: f32[8,1], index: 3, kind: input, shape index: {}]
  %s4 = inlined_call_operand.hbm [shape: f32[2,24,256], index: 4, kind: output, shape index: {}]
  %s5 = sld [smem:[#allocation0]]
  $region53: #{tpu_custom_call.1} parent=0
    _
  %s7 = ssub.s32 1, %s5
  %s8 = scalar_select 0, %s7, %s5
  $region1: #{tpu_custom_call.1} parent=0
    #allocation4 [shape = 'u8[65536]{0}', space=vmem, size = 0x10000, scoped, tag = 'input window, operand 1']
    #allocation5 [shape = 's32[2]{0}', space=sflag, size = 0x8, scoped, tag = 'scoped memory for tpu_custom_call.1']
    #allocation6 [shape = 's32[2]{0}', space=sflag, size = 0x8, scoped, tag = 'scoped memory for tpu_custom_call.1']
    #allocation7 [shape = 'u8[49152]{0}', space=vmem, size = 0xc000, scoped, tag = 'output window, operand 0']
    %9 = vsyncpa [#allocation5], 0
    %s10 = scalar_lea.sflag [#allocation5], 1
    %11 = vsyncpa %s10, 0
    %12 = vsyncpa [#allocation6], 0
    %s13 = scalar_lea.sflag [#allocation6], 1
    %14 = vsyncpa %s13, 0
    loop: start=0, step=1, limit=4
    $region2: #{tpu_custom_call.1} parent=1 // loop_pre_header
      _
    $region3: #{tpu_custom_call.1} parent=1 // loop_header
      %s16 = sphi 0, %s20
      %p17 = scmp.ge.s32.totalorder %s16, 4
      %s23 = sphi 0, %s35
      %s24 = sphi 0, %s31
      %s25 = sphi 0, %s23
      %s26 = sphi 0, %s24
      %s27 = sphi 0, %s25
      %s28 = sphi 0, %s26
      %s38 = sphi 0, %s40
      %s41 = sphi 0, %s38
      %s42 = sphi 0, %s41
      %s58 = sphi 0, %s42
      %s62 = sphi 0, %s62
      %s64 = sphi 0, %s62
      %s65 = sphi 0, %s64
      %s79 = sphi 0, %s65
      %s83 = sphi 0, %s83
      %s85 = sphi 0, %s83
      %s86 = sphi 0, %s85
      %s100 = sphi 0, %s86
      %s108 = sphi 0, %s110
      %s111 = sphi 0, %s108
      %s112 = sphi 0, %s111
      %s128 = sphi 0, %s112
    $region4: #{tpu_custom_call.1} parent=1 // loop_header_branch
      %19 = sbr.rel (%p17) target = $region8
    $region5: #{tpu_custom_call.1} parent=1 // loop_body
      %s21 = ssub.s32 %s16, 1
      %s22 = ssub.s32 %s16, 2
      %s29 = sadd.s32 1, %s24
      %p30 = scmp.ge.s32.totalorder %s29, 1
      %s31 = scalar_select %p30, 0, %s29
      %s32 = sadd.s32 1, %s23
      %s33 = scalar_select %p30, %s32, %s23
      %p34 = scmp.ge.s32.totalorder %s33, 2
      %s35 = scalar_select %p34, 0, %s33
      %s36 = ssub.s32 %s23, %s35
      %p37 = scmp.eq.s32.totalorder %s36, 0
      %s39 = sadd.s32 %s38, 1
      %s40 = scalar_select %p37, %s38, %s39
      %p43 = pneg %p37
      %p44 = scmp.eq.s32.totalorder %s16, 1
      %p45 = por %p43, %p44
      %p46 = scmp.ne.s32.totalorder %s38, %s41
      %p47 = scmp.eq.s32.totalorder %s16, 0
      %p48 = por %p46, %p47
      %p49 = scmp.ne.s32.totalorder %s38, %s41
      %p50 = scmp.eq.s32.totalorder %s21, 1
      %p51 = por %p49, %p50
      %p52 = scmp.ne.s32.totalorder %s41, %s42
      %p53 = scmp.eq.s32.totalorder %s21, 0
      %p54 = por %p52, %p53
      %p55 = scmp.ne.s32.totalorder %s41, %s42
      %p56 = scmp.eq.s32.totalorder %s22, 1
      %p57 = por %p55, %p56
      %p59 = scmp.ne.s32.totalorder %s42, %s58
      %p60 = scmp.eq.s32.totalorder %s22, 0
      %p61 = por %p59, %p60
      %s63 = sadd.s32 %s62, 1
      %p66 = scmp.eq.s32.totalorder %s16, 1
      %p67 = scmp.ne.s32.totalorder %s62, %s64
      %p68 = scmp.eq.s32.totalorder %s16, 0
      %p69 = por %p67, %p68
      %p70 = scmp.ne.s32.totalorder %s62, %s64
      %p71 = scmp.eq.s32.totalorder %s21, 1
      %p72 = por %p70, %p71
      %p73 = scmp.ne.s32.totalorder %s64, %s65
      %p74 = scmp.eq.s32.totalorder %s21, 0
      %p75 = por %p73, %p74
      %p76 = scmp.ne.s32.totalorder %s64, %s65
      %p77 = scmp.eq.s32.totalorder %s22, 1
      %p78 = por %p76, %p77
      %p80 = scmp.ne.s32.totalorder %s65, %s79
      %p81 = scmp.eq.s32.totalorder %s22, 0
      %p82 = por %p80, %p81
      %s84 = sadd.s32 %s83, 1
      %p87 = scmp.eq.s32.totalorder %s16, 1
      %p88 = scmp.ne.s32.totalorder %s83, %s85
      %p89 = scmp.eq.s32.totalorder %s16, 0
      %p90 = por %p88, %p89
      %p91 = scmp.ne.s32.totalorder %s83, %s85
      %p92 = scmp.eq.s32.totalorder %s21, 1
      %p93 = por %p91, %p92
      %p94 = scmp.ne.s32.totalorder %s85, %s86
      %p95 = scmp.eq.s32.totalorder %s21, 0
      %p96 = por %p94, %p95
      %p97 = scmp.ne.s32.totalorder %s85, %s86
      %p98 = scmp.eq.s32.totalorder %s22, 1
      %p99 = por %p97, %p98
      %p101 = scmp.ne.s32.totalorder %s86, %s100
      %p102 = scmp.eq.s32.totalorder %s22, 0
      %p103 = por %p101, %p102
      %s104 = ssub.s32 %s23, %s35
      %s105 = ssub.s32 %s24, %s31
      %s106 = sor.u32 %s104, %s105
      %p107 = scmp.eq.s32.totalorder %s106, 0
      %s109 = sadd.s32 %s108, 1
      %s110 = scalar_select %p107, %s108, %s109
      %p113 = pneg %p107
      %p114 = scmp.eq.s32.totalorder %s16, 1
      %p115 = por %p113, %p114
      %p116 = scmp.ne.s32.totalorder %s108, %s111
      %p117 = scmp.eq.s32.totalorder %s16, 0
      %p118 = por %p116, %p117
      %p119 = scmp.ne.s32.totalorder %s108, %s111
      %p120 = scmp.eq.s32.totalorder %s21, 1
      %p121 = por %p119, %p120
      %p122 = scmp.ne.s32.totalorder %s111, %s112
      %p123 = scmp.eq.s32.totalorder %s21, 0
      %p124 = por %p122, %p123
      %p125 = scmp.ne.s32.totalorder %s111, %s112
      %p126 = scmp.eq.s32.totalorder %s22, 1
      %p127 = por %p125, %p126
      %p129 = scmp.ne.s32.totalorder %s112, %s128
      %p130 = scmp.eq.s32.totalorder %s22, 0
      %p131 = por %p129, %p130
      %p132 = scmp.le.s32.totalorder 1, %s16
      %p133 = scmp.lt.s32.totalorder %s16, 3
      %p134 = pnand %p132, %p133
      %p135 = pneg %p134
      // Predicated region
      $region9: #{tpu_custom_call.1} parent=5 // pred_check
        _
      $region10: #{tpu_custom_call.1} parent=5 // pred_check_branch
        %137 = sbr.rel (%p134) target = $region12
      $region11: #{tpu_custom_call.1} parent=5 // pred_region
        %s138 = ssub.s32 %s16, 1
        // Predicated region
        $region13: #{tpu_custom_call.1} parent=11 // pred_check
          %p139 = pneg %p75
        $region14: #{tpu_custom_call.1} parent=11 // pred_check_branch
          %141 = sbr.rel (%p139) target = $region16
        $region15: #{tpu_custom_call.1} parent=11 // pred_region
          _
        $region16: #{tpu_custom_call.1} parent=11 // pred_fallthru
          _
        // Predicated region
        $region17: #{tpu_custom_call.1} parent=11 // pred_check
          %p142 = pneg %p96
        $region18: #{tpu_custom_call.1} parent=11 // pred_check_branch
          %144 = sbr.rel (%p142) target = $region20
        $region19: #{tpu_custom_call.1} parent=11 // pred_region
          _
        $region20: #{tpu_custom_call.1} parent=11 // pred_fallthru
          _
      $region12: #{tpu_custom_call.1} parent=5 // pred_fallthru
        _
      %p145 = scmp.lt.s32.totalorder %s16, 2
      // Predicated region
      $region21: #{tpu_custom_call.1} parent=5 // pred_check
        %p146 = pneg %p145
      $region22: #{tpu_custom_call.1} parent=5 // pred_check_branch
        %148 = sbr.rel (%p146) target = $region24
      $region23: #{tpu_custom_call.1} parent=5 // pred_region
        // Predicated region
        $region25: #{tpu_custom_call.1} parent=23 // pred_check
          %p149 = pneg %p48
        $region26: #{tpu_custom_call.1} parent=23 // pred_check_branch
          %151 = sbr.rel (%p149) target = $region28
        $region27: #{tpu_custom_call.1} parent=23 // pred_region
          %s152 = sand.u32 %s38, 1
          %s153 = scalar_lea.sflag [#allocation5], %s152
          %s154 = sand.u32 %s38, 1
          %s155 = smul.addr %s154, 64
          %s156 = scalar_lea.vmem [#allocation4], %s155
          %158 = vsyncadd %s153, 0
          %s159 = smul.addr %s23, 8
          %s160 = smul.addr %s159, 8
          %s161 = scalar_lea.hbm %s1, %s160
          %s162 = sshll.u32 %s161, 4
          %s163 = int_to_ptr.hbm [resolvable:$true] %s162
          %s164 = sshll.u32 %s156, 4
          %s165 = int_to_ptr.vmem [resolvable:$true] %s164
          %170 = dma.hbm_to_vmem [thread:$0]  %s163, 1024, %s165, %s153, 128, 128, 8
        $region28: #{tpu_custom_call.1} parent=23 // pred_fallthru
          _
      $region24: #{tpu_custom_call.1} parent=5 // pred_fallthru
        _
      %p171 = scmp.le.s32.totalorder 1, %s16
      %p172 = scmp.lt.s32.totalorder %s16, 3
      %p173 = pnand %p171, %p172
      %p174 = pneg %p173
      // Predicated region
      $region29: #{tpu_custom_call.1} parent=5 // pred_check
        _
      $region30: #{tpu_custom_call.1} parent=5 // pred_check_branch
        %176 = sbr.rel (%p173) target = $region32
      $region31: #{tpu_custom_call.1} parent=5 // pred_region
        %s177 = ssub.s32 %s16, 1
        %s178 = sand.u32 %s41, 1
        %s179 = scalar_lea.sflag [#allocation5], %s178
        %s180 = sand.u32 %s41, 1
        %s181 = smul.addr %s180, 64
        %s182 = scalar_lea.vmem [#allocation4], %s181
        // Predicated region
        $region33: #{tpu_custom_call.1} parent=31 // pred_check
          %p183 = pneg %p54
        $region34: #{tpu_custom_call.1} parent=31 // pred_check_branch
          %185 = sbr.rel (%p183) target = $region36
        $region35: #{tpu_custom_call.1} parent=31 // pred_region
          %187 = dma.done %s179, 1024
        $region36: #{tpu_custom_call.1} parent=31 // pred_fallthru
          _
        %s188 = sand.u32 %s41, 1
        %s189 = scalar_lea.sflag [#allocation5], %s188
        %s190 = sand.u32 %s41, 1
        %s191 = smul.addr %s190, 64
        %s192 = scalar_lea.vmem [#allocation4], %s191
        %p193 = pneg %p54
        %p194 = pneg %p51
        %p195 = pneg %p75
        %p196 = pneg %p72
        %p197 = pneg %p96
        %p198 = pneg %p93
        %p199 = pneg %p124
        %p200 = pneg %p121
        %s201 = sand.u32 %s111, 1
        %s202 = scalar_lea.sflag [#allocation6], %s201
        %s203 = sand.u32 %s111, 1
        %s204 = smul.addr %s203, 48
        %s205 = scalar_lea.vmem [#allocation7], %s204
        %s206 = smul.u32 2, %s26
        %s207 = smul.u32 %s26, 256
        %s208 = sshra.s32 %s207, 7
        %s209 = sand.u32 %s207, 127
        %s210 = smul.u32 %s25, 4
        %s211 = sadd.s32 %s208, %s210
        %s212 = smul.addr %s211, 8
        %s213 = scalar_lea.hbm %s0, %s212
        // Predicated region
        $region37: #{tpu_custom_call.1} parent=31 // pred_check
          _
        $region38: #{tpu_custom_call.1} parent=31 // pred_check_branch
          %215 = sbr.rel target = $region40
        $region39: #{tpu_custom_call.1} parent=31 // pred_region
          %216 = sst [smem:[#allocation10]] [#allocation9]
          %217 = sst [smem:[#allocation11]] [#allocation8]
        $region40: #{tpu_custom_call.1} parent=31 // pred_fallthru
          _
        %219 = shalt.err (0)
        %s221 = sshll.u32 %s213, 4
        %s222 = int_to_ptr.hbm [resolvable:$true] %s221
        %s223 = sshll.u32 %s205, 4
        %s224 = int_to_ptr.vmem [resolvable:$true] %s223
        %226 = dma.hbm_to_vmem [thread:$0]  %s222, 512, %s224, [#allocation3]
        %vm227 = vcmask 519168
        %228 = vst.msk [vmem:[#allocation2] sm:$0xf] %vm227, 0.0
        %v229 = vld [vmem:[%s182 + $0x2] sm:$0x1]
        %v230 = vld [vmem:[%s182 + $0x12] sm:$0x1]
        %v231 = vld [vmem:[%s182 + $0x22] sm:$0x1]
        %v232 = vld [vmem:[%s182 + $0x32] sm:$0x1]
        %v237 = vrot.slane %v230, 7
        %vm238 = vcmask 1041409
        %v239 = vsel %vm238, %v237, %v229
        %v240 = vrot.slane %v231, 6
        %vm241 = vcmask 1042434
        %v242 = vsel %vm241, %v240, %v239
        %v243 = vrot.slane %v232, 5
        %vm244 = vcmask 1043459
        %v245 = vsel %vm244, %v243, %v242
        %246 = vrot.lane.b32.xlu0 %v245, 64
        %v247 = vpop.permute.xlu0 %246
        %vm249 = vcmask 1043968
        %250 = vst.msk [vmem:[#allocation2] sm:$0xf] %vm249, %v247
        %v251 = vld [vmem:[%s182 + $0x6] sm:$0x1]
        %v252 = vld [vmem:[%s182 + $0x16] sm:$0x1]
        %v253 = vld [vmem:[%s182 + $0x26] sm:$0x1]
        %v254 = vld [vmem:[%s182 + $0x36] sm:$0x1]
        %v259 = vrot.slane %v252, 7
        %v260 = vsel %vm238, %v259, %v251
        %v261 = vrot.slane %v253, 6
        %v262 = vsel %vm241, %v261, %v260
        %v263 = vrot.slane %v254, 5
        %v264 = vsel %vm244, %v263, %v262
        %266 = vst.msk [vmem:[#allocation2 + $0x8] sm:$0xf] %vm227, %v264
        %v267 = vld [vmem:[%s182 + $0xa] sm:$0x1]
        %v268 = vld [vmem:[%s182 + $0x1a] sm:$0x1]
        %v269 = vld [vmem:[%s182 + $0x2a] sm:$0x1]
        %v270 = vld [vmem:[%s182 + $0x3a] sm:$0x1]
        %v275 = vrot.slane %v268, 7
        %v276 = vsel %vm238, %v275, %v267
        %v277 = vrot.slane %v269, 6
        %v278 = vsel %vm241, %v277, %v276
        %v279 = vrot.slane %v270, 5
        %v280 = vsel %vm244, %v279, %v278
        %281 = vrot.lane.b32.xlu0 %v280, 64
        %v282 = vpop.permute.xlu0 %281
        %284 = vst.msk [vmem:[#allocation2 + $0x8] sm:$0xf] %vm249, %v282
        %vm285 = vcmask 523268
        %286 = vst.msk [vmem:[#allocation2] sm:$0xf0] %vm285, 0.0
        %v287 = vld [vmem:[%s182 + $0x3] sm:$0x1]
        %v288 = vld [vmem:[%s182 + $0x13] sm:$0x1]
        %v289 = vld [vmem:[%s182 + $0x23] sm:$0x1]
        %v290 = vld [vmem:[%s182 + $0x33] sm:$0x1]
        %v295 = vrot.slane %v287, 4
        %v296 = vrot.slane %v288, 3
        %vm297 = vcmask 1045509
        %v298 = vsel %vm297, %v296, %v295
        %v299 = vrot.slane %v289, 2
        %vm300 = vcmask 1046534
        %v301 = vsel %vm300, %v299, %v298
        %v302 = vrot.slane %v290, 1
        %vm303 = vcmask 1047559
        %v304 = vsel %vm303, %v302, %v301
        %305 = vrot.lane.b32.xlu0 %v304, 64
        %v306 = vpop.permute.xlu0 %305
        %vm308 = vcmask 1048068
        %309 = vst.msk [vmem:[#allocation2] sm:$0xf0] %vm308, %v306
        %v310 = vld [vmem:[%s182 + $0x7] sm:$0x1]
        %v311 = vld [vmem:[%s182 + $0x17] sm:$0x1]
        %v312 = vld [vmem:[%s182 + $0x27] sm:$0x1]
        %v313 = vld [vmem:[%s182 + $0x37] sm:$0x1]
        %v318 = vrot.slane %v310, 4
        %v319 = vrot.slane %v311, 3
        %v320 = vsel %vm297, %v319, %v318
        %v321 = vrot.slane %v312, 2
        %v322 = vsel %vm300, %v321, %v320
        %v323 = vrot.slane %v313, 1
        %v324 = vsel %vm303, %v323, %v322
        %326 = vst.msk [vmem:[#allocation2 + $0x8] sm:$0xf0] %vm285, %v324
        %v327 = vld [vmem:[%s182 + $0xb] sm:$0x1]
        %v328 = vld [vmem:[%s182 + $0x1b] sm:$0x1]
        %v329 = vld [vmem:[%s182 + $0x2b] sm:$0x1]
        %v330 = vld [vmem:[%s182 + $0x3b] sm:$0x1]
        %v335 = vrot.slane %v327, 4
        %v336 = vrot.slane %v328, 3
        %v337 = vsel %vm297, %v336, %v335
        %v338 = vrot.slane %v329, 2
        %v339 = vsel %vm300, %v338, %v337
        %v340 = vrot.slane %v330, 1
        %v341 = vsel %vm303, %v340, %v339
        %342 = vrot.lane.b32.xlu0 %v341, 64
        %v343 = vpop.permute.xlu0 %342
        %345 = vst.msk [vmem:[#allocation2 + $0x8] sm:$0xf0] %vm308, %v343
        %v346 = vld [vmem:[%s182] sm:$0x1]
        %v347 = vld [vmem:[%s182 + $0x10] sm:$0x1]
        %v348 = vld [vmem:[%s182 + $0x20] sm:$0x1]
        %v349 = vld [vmem:[%s182 + $0x30] sm:$0x1]
        %v354 = vrot.slane %v347, 7
        %v355 = vsel %vm238, %v354, %v346
        %v356 = vrot.slane %v348, 6
        %v357 = vsel %vm241, %v356, %v355
        %v358 = vrot.slane %v349, 5
        %v359 = vsel %vm244, %v358, %v357
        %361 = vst.msk [vmem:[#allocation2 + $0x10] sm:$0xf] %vm227, %v359
        %v362 = vld [vmem:[%s182 + $0x4] sm:$0x1]
        %v363 = vld [vmem:[%s182 + $0x14] sm:$0x1]
        %v364 = vld [vmem:[%s182 + $0x24] sm:$0x1]
        %v365 = vld [vmem:[%s182 + $0x34] sm:$0x1]
        %v370 = vrot.slane %v363, 7
        %v371 = vsel %vm238, %v370, %v362
        %v372 = vrot.slane %v364, 6
        %v373 = vsel %vm241, %v372, %v371
        %v374 = vrot.slane %v365, 5
        %v375 = vsel %vm244, %v374, %v373
        %376 = vrot.lane.b32.xlu0 %v375, 64
        %v377 = vpop.permute.xlu0 %376
        %379 = vst.msk [vmem:[#allocation2 + $0x10] sm:$0xf] %vm249, %v377
        %v380 = vld [vmem:[%s182 + $0x8] sm:$0x1]
        %v381 = vld [vmem:[%s182 + $0x18] sm:$0x1]
        %v382 = vld [vmem:[%s182 + $0x28] sm:$0x1]
        %v383 = vld [vmem:[%s182 + $0x38] sm:$0x1]
        %v388 = vrot.slane %v381, 7
        %v389 = vsel %vm238, %v388, %v380
        %v390 = vrot.slane %v382, 6
        %v391 = vsel %vm241, %v390, %v389
        %v392 = vrot.slane %v383, 5
        %v393 = vsel %vm244, %v392, %v391
        %395 = vst.msk [vmem:[#allocation2 + $0x18] sm:$0xf] %vm227, %v393
        %v396 = vld [vmem:[%s182 + $0xc] sm:$0x1]
        %v397 = vld [vmem:[%s182 + $0x1c] sm:$0x1]
        %v398 = vld [vmem:[%s182 + $0x2c] sm:$0x1]
        %v399 = vld [vmem:[%s182 + $0x3c] sm:$0x1]
        %v404 = vrot.slane %v397, 7
        %v405 = vsel %vm238, %v404, %v396
        %v406 = vrot.slane %v398, 6
        %v407 = vsel %vm241, %v406, %v405
        %v408 = vrot.slane %v399, 5
        %v409 = vsel %vm244, %v408, %v407
        %410 = vrot.lane.b32.xlu0 %v409, 64
        %v411 = vpop.permute.xlu0 %410
        %413 = vst.msk [vmem:[#allocation2 + $0x18] sm:$0xf] %vm249, %v411
        %v414 = vld [vmem:[%s182 + $0x1] sm:$0x1]
        %v415 = vld [vmem:[%s182 + $0x11] sm:$0x1]
        %v416 = vld [vmem:[%s182 + $0x21] sm:$0x1]
        %v417 = vld [vmem:[%s182 + $0x31] sm:$0x1]
        %v422 = vrot.slane %v414, 4
        %v423 = vrot.slane %v415, 3
        %v424 = vsel %vm297, %v423, %v422
        %v425 = vrot.slane %v416, 2
        %v426 = vsel %vm300, %v425, %v424
        %v427 = vrot.slane %v417, 1
        %v428 = vsel %vm303, %v427, %v426
        %430 = vst.msk [vmem:[#allocation2 + $0x10] sm:$0xf0] %vm285, %v428
        %v431 = vld [vmem:[%s182 + $0x5] sm:$0x1]
        %v432 = vld [vmem:[%s182 + $0x15] sm:$0x1]
        %v433 = vld [vmem:[%s182 + $0x25] sm:$0x1]
        %v434 = vld [vmem:[%s182 + $0x35] sm:$0x1]
        %v439 = vrot.slane %v431, 4
        %v440 = vrot.slane %v432, 3
        %v441 = vsel %vm297, %v440, %v439
        %v442 = vrot.slane %v433, 2
        %v443 = vsel %vm300, %v442, %v441
        %v444 = vrot.slane %v434, 1
        %v445 = vsel %vm303, %v444, %v443
        %446 = vrot.lane.b32.xlu0 %v445, 64
        %v447 = vpop.permute.xlu0 %446
        %449 = vst.msk [vmem:[#allocation2 + $0x10] sm:$0xf0] %vm308, %v447
        %v450 = vld [vmem:[%s182 + $0x9] sm:$0x1]
        %v451 = vld [vmem:[%s182 + $0x19] sm:$0x1]
        %v452 = vld [vmem:[%s182 + $0x29] sm:$0x1]
        %v453 = vld [vmem:[%s182 + $0x39] sm:$0x1]
        %v458 = vrot.slane %v450, 4
        %v459 = vrot.slane %v451, 3
        %v460 = vsel %vm297, %v459, %v458
        %v461 = vrot.slane %v452, 2
        %v462 = vsel %vm300, %v461, %v460
        %v463 = vrot.slane %v453, 1
        %v464 = vsel %vm303, %v463, %v462
        %466 = vst.msk [vmem:[#allocation2 + $0x18] sm:$0xf0] %vm285, %v464
        %v467 = vld [vmem:[%s182 + $0xd] sm:$0x1]
        %v468 = vld [vmem:[%s182 + $0x1d] sm:$0x1]
        %v469 = vld [vmem:[%s182 + $0x2d] sm:$0x1]
        %v470 = vld [vmem:[%s182 + $0x3d] sm:$0x1]
        %v475 = vrot.slane %v467, 4
        %v476 = vrot.slane %v468, 3
        %v477 = vsel %vm297, %v476, %v475
        %v478 = vrot.slane %v469, 2
        %v479 = vsel %vm300, %v478, %v477
        %v480 = vrot.slane %v470, 1
        %v481 = vsel %vm303, %v480, %v479
        %482 = vrot.lane.b32.xlu0 %v481, 64
        %v483 = vpop.permute.xlu0 %482
        %485 = vst.msk [vmem:[#allocation2 + $0x18] sm:$0xf0] %vm308, %v483
        %v486 = vld [vmem:[%s182 + $0x2] sm:$0x1]
        %v487 = vld [vmem:[%s182 + $0x12] sm:$0x1]
        %v488 = vld [vmem:[%s182 + $0x22] sm:$0x1]
        %v489 = vld [vmem:[%s182 + $0x32] sm:$0x1]
        %v494 = vrot.slane %v487, 7
        %v495 = vsel %vm238, %v494, %v486
        %v496 = vrot.slane %v488, 6
        %v497 = vsel %vm241, %v496, %v495
        %v498 = vrot.slane %v489, 5
        %v499 = vsel %vm244, %v498, %v497
        %501 = vst.msk [vmem:[#allocation2 + $0x20] sm:$0xf] %vm227, %v499
        %v502 = vld [vmem:[%s182 + $0x6] sm:$0x1]
        %v503 = vld [vmem:[%s182 + $0x16] sm:$0x1]
        %v504 = vld [vmem:[%s182 + $0x26] sm:$0x1]
        %v505 = vld [vmem:[%s182 + $0x36] sm:$0x1]
        %v510 = vrot.slane %v503, 7
        %v511 = vsel %vm238, %v510, %v502
        %v512 = vrot.slane %v504, 6
        %v513 = vsel %vm241, %v512, %v511
        %v514 = vrot.slane %v505, 5
        %v515 = vsel %vm244, %v514, %v513
        %516 = vrot.lane.b32.xlu0 %v515, 64
        %v517 = vpop.permute.xlu0 %516
        %519 = vst.msk [vmem:[#allocation2 + $0x20] sm:$0xf] %vm249, %v517
        %v520 = vld [vmem:[%s182 + $0xa] sm:$0x1]
        %v521 = vld [vmem:[%s182 + $0x1a] sm:$0x1]
        %v522 = vld [vmem:[%s182 + $0x2a] sm:$0x1]
        %v523 = vld [vmem:[%s182 + $0x3a] sm:$0x1]
        %v528 = vrot.slane %v521, 7
        %v529 = vsel %vm238, %v528, %v520
        %v530 = vrot.slane %v522, 6
        %v531 = vsel %vm241, %v530, %v529
        %v532 = vrot.slane %v523, 5
        %v533 = vsel %vm244, %v532, %v531
        %535 = vst.msk [vmem:[#allocation2 + $0x28] sm:$0xf] %vm227, %v533
        %v536 = vld [vmem:[%s182 + $0xe] sm:$0x1]
        %v537 = vld [vmem:[%s182 + $0x1e] sm:$0x1]
        %v538 = vld [vmem:[%s182 + $0x2e] sm:$0x1]
        %v539 = vld [vmem:[%s182 + $0x3e] sm:$0x1]
        %v544 = vrot.slane %v537, 7
        %v545 = vsel %vm238, %v544, %v536
        %v546 = vrot.slane %v538, 6
        %v547 = vsel %vm241, %v546, %v545
        %v548 = vrot.slane %v539, 5
        %v549 = vsel %vm244, %v548, %v547
        %550 = vrot.lane.b32.xlu0 %v549, 64
        %v551 = vpop.permute.xlu0 %550
        %553 = vst.msk [vmem:[#allocation2 + $0x28] sm:$0xf] %vm249, %v551
        %v554 = vld [vmem:[%s2] sm:$0xff]
        %v555 = vld [vmem:[#allocation2] sm:$0xff]
        %v556 = vld [vmem:[#allocation2 + $0x8] sm:$0xff]
        %v557 = vld [vmem:[#allocation2 + $0x10] sm:$0xff]
        %v558 = vld [vmem:[#allocation2 + $0x18] sm:$0xff]
        %v559 = vld [vmem:[#allocation2 + $0x20] sm:$0xf]
        %v560 = vld [vmem:[#allocation2 + $0x28] sm:$0xf]
        %v561 = vld [vmem:[%s3] sm:$0xff]
        %563 = vset.pattern.permute.xlu0 0
        %564 = vperm.xlu0 %563, %v561
        %v565 = vpop.permute.xlu0 %564
        %vm567 = vcmask 162816
        %v569 = vsel %vm567, %v554, 0
        %vm571 = vcmask 1043456
        %v573 = vsel %vm571, %v559, 0
        %v576 = vsel %vm571, %v560, 0
        %578 = vmatpush.msra.mxu0 0.0
        %579 = vmatpush.msra.mxu0 0.0
        %580 = vmatpush.msra.mxu0 0.0
        %581 = vmatpush.msra.mxu0 0.0
        %582 = vmatpush.msra.mxu0 0.0
        %583 = vmatpush.msra.mxu0 0.0
        %584 = vmatpush.msra.mxu0 0.0
        %585 = vmatpush.msra.mxu0 0.0
        %586 = vmatpush.msra.mxu0 0.0
        %587 = vmatpush.msra.mxu0 0.0
        %588 = vmatpush.msra.mxu0 0.0
        %589 = vmatpush.msra.mxu0 0.0
        %590 = vmatpush.msra.mxu0 0.0
        %591 = vmatpush.msra.mxu0 %v573
        %592 = vmatpush.msra.mxu0 %v557
        %593 = vmatpush.msra.mxu0 %v555
        %594 = vmatmul.f32.gmra.mxu0 %v569
        %v595 = vpop.f32.mrf.mxu0
        %v596 = vadd.f32 %v565, %v595
        %597 = vdwg.mxu0
        %598 = vmatpush.msra.mxu0 0.0
        %599 = vmatpush.msra.mxu0 0.0
        %600 = vmatpush.msra.mxu0 0.0
        %601 = vmatpush.msra.mxu0 0.0
        %602 = vmatpush.msra.mxu0 0.0
        %603 = vmatpush.msra.mxu0 0.0
        %604 = vmatpush.msra.mxu0 0.0
        %605 = vmatpush.msra.mxu0 0.0
        %606 = vmatpush.msra.mxu0 0.0
        %607 = vmatpush.msra.mxu0 0.0
        %608 = vmatpush.msra.mxu0 0.0
        %609 = vmatpush.msra.mxu0 0.0
        %610 = vmatpush.msra.mxu0 0.0
        %611 = vmatpush.msra.mxu0 %v576
        %612 = vmatpush.msra.mxu0 %v558
        %613 = vmatpush.msra.mxu0 %v556
        %614 = vmatmul.f32.gmra.mxu0 %v569
        %v615 = vpop.f32.mrf.mxu0
        %v616 = vadd.f32 %v565, %v615
        %617 = vdwg.mxu0
        %v618 = vmax.f32 %v596, 0.0
        %v619 = vmax.f32 %v616, 0.0
        %620 = vst [vmem:[%s205 + $0x20] sm:$0xff] %v618
        %621 = vst [vmem:[%s205 + $0x28] sm:$0xff] %v619
        %s622 = smul.u32 8, 2
        %s623 = smul.u32 %s622, 2
        %s624 = sshll.u32 %s623, 4
        %625 = dma.done [#allocation3], %s624
        %s626 = sand.u32 %s111, 1
        %s627 = scalar_lea.sflag [#allocation6], %s626
        %s628 = sand.u32 %s111, 1
        %s629 = smul.addr %s628, 48
        %s630 = scalar_lea.vmem [#allocation7], %s629
        // Predicated region
        $region41: #{tpu_custom_call.1} parent=31 // pred_check
          %p631 = pneg %p121
        $region42: #{tpu_custom_call.1} parent=31 // pred_check_branch
          %633 = sbr.rel (%p631) target = $region44
        $region43: #{tpu_custom_call.1} parent=31 // pred_region
          %s634 = smul.u32 2, %s26
          %636 = vsyncadd %s627, 0
          %s637 = smul.addr %s25, 6
          %s638 = sadd.s32 %s634, %s637
          %s639 = smul.addr %s638, 8
          %s640 = scalar_lea.hbm %s4, %s639
          %s641 = sshll.u32 %s630, 4
          %s642 = int_to_ptr.vmem [resolvable:$true] %s641
          %s643 = sshll.u32 %s640, 4
          %s644 = int_to_ptr.hbm [resolvable:$true] %s643
          %649 = dma.vmem_to_hbm [thread:$0]  %s642, 768, %s644, %s627, 256, 256, 16
        $region44: #{tpu_custom_call.1} parent=31 // pred_fallthru
          _
      $region32: #{tpu_custom_call.1} parent=5 // pred_fallthru
        _
      %p650 = scmp.le.s32.totalorder 2, %s16
      // Predicated region
      $region45: #{tpu_custom_call.1} parent=5 // pred_check
        %p651 = pneg %p650
      $region46: #{tpu_custom_call.1} parent=5 // pred_check_branch
        %653 = sbr.rel (%p651) target = $region48
      $region47: #{tpu_custom_call.1} parent=5 // pred_region
        %s654 = ssub.s32 %s16, 2
        // Predicated region
        $region49: #{tpu_custom_call.1} parent=47 // pred_check
          %p655 = pneg %p127
        $region50: #{tpu_custom_call.1} parent=47 // pred_check_branch
          %657 = sbr.rel (%p655) target = $region52
        $region51: #{tpu_custom_call.1} parent=47 // pred_region
          %s658 = sand.u32 %s112, 1
          %s659 = scalar_lea.sflag [#allocation6], %s658
          %s660 = sand.u32 %s112, 1
          %s661 = smul.addr %s660, 48
          %s662 = scalar_lea.vmem [#allocation7], %s661
          %664 = dma.done %s659, 768
        $region52: #{tpu_custom_call.1} parent=47 // pred_fallthru
          _
      $region48: #{tpu_custom_call.1} parent=5 // pred_fallthru
        _
    $region6: #{tpu_custom_call.1} parent=1 // loop_footer
      %s20 = sadd.s32 1, %s16
    $region7: #{tpu_custom_call.1} parent=1 // loop_footer_branch
      %15 = sbr.rel target = $region3
    $region8: #{tpu_custom_call.1} parent=1 // loop_exit
      _
    %665 = vsyncpa [#allocation5], 1
    %s666 = scalar_lea.sflag [#allocation5], 1
    %667 = vsyncpa %s666, 1
    %668 = vsyncpa [#allocation6], 1
    %s669 = scalar_lea.sflag [#allocation6], 1
    %670 = vsyncpa %s669, 1
  %671 = vsyncmov [#allocation3]
  %s672 = vpop.sfrf %671
  %p673 = scmp.eq.s32.totalorder %s672, 0
  %p674 = pneg %p673
  %676 = shalt.err (%p674)

</llo_original>
